<compile_context>
chip_gen: v6e
topology: v6e:2x2x1
jax: 0.10.0
libtpu: 0.0.40
codegen_flags: <defaults>
</compile_context>

<pallas_src>
import functools

import jax
import jax.numpy as jnp
from jax import lax
from jax.experimental import pallas as pl
from jax.experimental.pallas import tpu as pltpu


def _round_up(v, m):
    return (v + m - 1) // m * m


def _cdiv(a, b):
    return -(-a // b)


_MIN_GOOD_BLOCK_BYTES = 2 * 1024 * 1024   # "big enough to amortize step cost"


def _vmem_capacity_bytes():
    """Physical VMEM of the current TPU generation (conservative fallback)."""
    try:
        cap = int(pltpu.get_tpu_info().vmem_capacity_bytes)
        if cap > 0:
            return cap
    except Exception:
        pass
    return 64 * 1024 * 1024   # assume v7x-sized VMEM if query unavailable


def _pick_bt(B, per_image_bytes, per_buf_budget):
    """Largest batch fusion that fits the per-buffer budget.

    Once the per-step block is already "big enough", prefer a bt that leaves
    an even number of batch grid steps (v7x: 2 TensorCores share the
    "parallel" axis). Otherwise just maximize the block size — on single-TC
    v5e/v6e there is nothing to gain from extra batch steps.
    """
    divisors = [d for d in range(1, B + 1)
                if B % d == 0 and d * per_image_bytes <= per_buf_budget]
    if not divisors:
        return 1
    big = [d for d in divisors if d * per_image_bytes >= _MIN_GOOD_BLOCK_BYTES]
    big_even = [d for d in big if (B // d) % 2 == 0]
    if big_even:
        return max(big_even)
    if big:
        return max(big)
    return max(divisors)


def _channel_attention_kernel(x_ref, w1_ref, w2_ref, o_ref, sum_ref, max_ref,
                              *, true_hw, hw_tile, bt):
    # x_ref : (bt, C, hw_tile)  block of the flattened (B, C, H*W) input
    # w1_ref: (Cr, C)           fc1 weight (1x1 conv, no bias) -- resident
    # w2_ref: (C, Cr)           fc2 weight (1x1 conv, no bias) -- resident
    # o_ref : (bt, 1, C)        lane-dense gate output
    # sum_ref/max_ref: (bt, C)  running spatial sum / max accumulators (f32)
    k = pl.program_id(1)
    nk = pl.num_programs(1)

    @pl.when(k == 0)
    def _init():
        sum_ref[...] = jnp.zeros(sum_ref.shape, dtype=sum_ref.dtype)
        max_ref[...] = jnp.full(max_ref.shape, -jnp.inf, dtype=max_ref.dtype)

    x = x_ref[...]                                        # (bt, C, hw_tile)
    rem = true_hw % hw_tile                               # valid lanes in last tile

    if rem == 0:
        # Every tile is fully valid: unmasked fast path.
        sum_ref[...] += jnp.sum(x.astype(jnp.float32), axis=2)
        max_ref[...] = jnp.maximum(max_ref[...],
                                   jnp.max(x, axis=2).astype(jnp.float32))
    else:
        @pl.when(k < nk - 1)
        def _body():
            sum_ref[...] += jnp.sum(x.astype(jnp.float32), axis=2)
            max_ref[...] = jnp.maximum(max_ref[...],
                                       jnp.max(x, axis=2).astype(jnp.float32))

        @pl.when(k == nk - 1)
        def _last():
            # Last tile overruns HW: its trailing lanes are garbage (no
            # wrapper pad), so mask both the sum (0) and the max (-inf).
            lane = lax.broadcasted_iota(jnp.int32, x.shape, 2)
            valid = lane < rem
            x32 = x.astype(jnp.float32)
            xs = jnp.where(valid, x32, 0.0)
            xm = jnp.where(valid, x32, -jnp.inf)
            sum_ref[...] += jnp.sum(xs, axis=2)
            max_ref[...] = jnp.maximum(max_ref[...], jnp.max(xm, axis=2))

    @pl.when(k == nk - 1)
    def _finalize():
        inv_hw = jnp.float32(1.0 / true_hw)
        avg = sum_ref[...] * inv_hw                       # (bt, C)
        mx = max_ref[...]                                 # (bt, C)
        # Stack avg rows then max rows -> one MXU pass per layer.
        stats = jnp.concatenate([avg, mx], axis=0)        # (2*bt, C)
        h = lax.dot_general(stats, w1_ref[...], (((1,), (1,)), ((), ())),
                            preferred_element_type=jnp.float32)   # (2*bt, Cr)
        h = jnp.maximum(h, 0.0)                                   # ReLU
        o2 = lax.dot_general(h, w2_ref[...], (((1,), (1,)), ((), ())),
                             preferred_element_type=jnp.float32)  # (2*bt, C)
        gate = jax.nn.sigmoid(o2[:bt] + o2[bt:])                  # (bt, C)
        o_ref[...] = gate[:, None, :].astype(o_ref.dtype)


def channel_attention(x_nchw, w1, w2, *, max_block_bytes=None):
    """x_nchw: (B, C, H, W); w1: (C//r, C); w2: (C, C//r).
    Returns sigmoid(fc2(relu(fc1(avgpool(x)))) + fc2(relu(fc1(maxpool(x)))))
    with shape (B, C, 1, 1) (same semantics as the PyTorch ChannelAttention).
    max_block_bytes optionally caps the per-buffer x block size (testing)."""
    B, C, H, W = x_nchw.shape
    Cr = w1.shape[0]
    assert w1.shape == (Cr, C) and w2.shape == (C, Cr)

    HW = H * W
    x = x_nchw.reshape(B, C, HW)
    itemsize = x.dtype.itemsize
    w_itemsize = w1.dtype.itemsize

    # --- generation-aware VMEM budget ------------------------------------
    vmem_cap = _vmem_capacity_bytes()
    # Scoped-VMEM cap: ~half of physical (32 MiB on 64 MiB v7x, 64 MiB on
    # 128 MiB v5e/v6e).
    scoped_cap = (32 * 1024 * 1024 if vmem_cap <= 64 * 1024 * 1024
                  else 64 * 1024 * 1024)
    aux_bytes = (2 * (w1.size + w2.size) * w_itemsize      # resident weights
                 + 4 * B * C * 4                           # scratch accumulators
                 + 2 * B * C * itemsize                    # output buffers
                 + 2 * 1024 * 1024)                        # slack
    per_buf_budget = max(128 * 1024,
                         min(8 * 1024 * 1024, (scoped_cap - aux_bytes) // 2))
    if max_block_bytes is not None:
        per_buf_budget = min(per_buf_budget, int(max_block_bytes))

    # --- tile selection ----------------------------------------------------
    hw128 = _round_up(HW, 128)
    per_image_bytes = C * hw128 * itemsize

    if per_image_bytes <= per_buf_budget:
        # Whole image's flattened spatial fits one block; fuse batch.
        hw_tile = hw128
        bt = _pick_bt(B, per_image_bytes, per_buf_budget)
    else:
        # Split the spatial axis with the fewest tiles that fit the budget so
        # the last tile carries only a small number of padded lanes.
        bt = 1
        num_k_target = _cdiv(per_image_bytes, per_buf_budget)
        hw_tile = _round_up(_cdiv(hw128, num_k_target), 128)
    num_k = _cdiv(HW, hw_tile)
    block_bytes = bt * C * hw_tile * itemsize

    kernel = functools.partial(_channel_attention_kernel,
                               true_hw=HW, hw_tile=hw_tile, bt=bt)

    cost = pl.CostEstimate(
        flops=int(4 * B * C * HW + 2 * (2 * B) * C * Cr * 2),
        transcendentals=int(B * C),
        bytes_accessed=int(B * C * HW * itemsize
                           + (w1.size + w2.size) * w_itemsize
                           + B * C * itemsize),
    )

    out = pl.pallas_call(
        kernel,
        out_shape=jax.ShapeDtypeStruct((B, 1, C), x.dtype),
        grid_spec=pltpu.PrefetchScalarGridSpec(
            num_scalar_prefetch=0,
            grid=(B // bt, num_k),
            in_specs=[
                pl.BlockSpec((bt, C, hw_tile), lambda b, k: (b, 0, k)),
                pl.BlockSpec((Cr, C), lambda b, k: (0, 0)),   # fc1, resident
                pl.BlockSpec((C, Cr), lambda b, k: (0, 0)),   # fc2, resident
            ],
            out_specs=pl.BlockSpec((bt, 1, C), lambda b, k: (b, 0, 0)),
            scratch_shapes=[
                pltpu.VMEM((bt, C), jnp.float32),   # running sum
                pltpu.VMEM((bt, C), jnp.float32),   # running max
            ],
        ),
        compiler_params=pltpu.CompilerParams(
            dimension_semantics=("parallel", "arbitrary"),
            vmem_limit_bytes=int(min(scoped_cap,
                                     max(2 * block_bytes + aux_bytes,
                                         16 * 1024 * 1024))),
        ),
        cost_estimate=cost,
    )(x, w1, w2)

    return out.reshape(B, C, 1, 1)


def _reference(x_nchw, w1, w2):
    # Pure-JAX reference replicating the PyTorch module semantics.
    avg = jnp.mean(x_nchw, axis=(2, 3))                 # (B, C)
    mx = jnp.max(x_nchw, axis=(2, 3))                   # (B, C)

    def mlp(v):  # v: (B, C)
        h = jnp.maximum(v @ w1.T, 0.0)                  # (B, Cr)
        return h @ w2.T                                 # (B, C)

    out = jax.nn.sigmoid(mlp(avg) + mlp(mx))
    return out[:, :, None, None]


if __name__ == "__main__":
    def run_case(B, C, H, W, ratio, key, max_block_bytes=None):
        kx, kw1, kw2 = jax.random.split(key, 3)
        Cr = C // ratio
        x = jax.random.normal(kx, (B, C, H, W), dtype=jnp.float32)
        w1 = jax.random.normal(kw1, (Cr, C), dtype=jnp.float32) * (1.0 / jnp.sqrt(C))
        w2 = jax.random.normal(kw2, (C, Cr), dtype=jnp.float32) * (1.0 / jnp.sqrt(Cr))

        y = jax.block_until_ready(
            channel_attention(x, w1, w2, max_block_bytes=max_block_bytes))
        y_ref = _reference(x, w1, w2)
        assert y.shape == (B, C, 1, 1)
        assert jnp.allclose(y, y_ref, atol=2e-5, rtol=1e-5), \
            float(jnp.max(jnp.abs(y - y_ref)))

    key = jax.random.PRNGKey(0)
    k1, k2, k3 = jax.random.split(key, 3)

    # Primary case: B=2, C=32, 16x16 spatial -> single fused block, no mask.
    run_case(2, 32, 16, 16, 8, k1)

    # 24x24 spatial (576, not a multiple of 128) -> exercises the last-tile
    # masked path and full batch fusion (bt=4, single grid step).
    run_case(4, 32, 24, 24, 8, k2)

    # Tiny budget override -> forces a multi-step spatial reduction
    # (num_k=2, masked final tile) to cover the streaming-accumulator path.
    run_case(2, 32, 24, 24, 8, k3, max_block_bytes=64 * 1024)

    print("KERNEL_OK")
</pallas_src>

<mosaic_0001>
module attributes {stable_mosaic.version = 11 : i64} {
  func.func @_channel_attention_kernel(%arg0: i32, %arg1: i32, %arg2: memref<2x32x256xf32, #tpu.memory_space<vmem>>, %arg3: memref<4x32xf32, #tpu.memory_space<vmem>>, %arg4: memref<32x4xf32, #tpu.memory_space<vmem>>, %arg5: memref<2x1x32xf32, #tpu.memory_space<vmem>>, %arg6: memref<2x32xf32, #tpu.memory_space<vmem>>, %arg7: memref<2x32xf32, #tpu.memory_space<vmem>>) attributes {dimension_semantics = [#tpu.dimension_semantics<parallel>, #tpu.dimension_semantics<arbitrary>], iteration_bounds = array<i64: 1, 1>, scalar_prefetch = 0 : i64, scratch_operands = 2 : i64, tpu.core_type = #tpu.core_type<tc>, window_params = [{transform_indices = @transform_0, window_bounds = array<i64: 2, 32, 256>}, {pipeline_mode = #tpu.pipeline_mode<synchronous>, transform_indices = @transform_1, window_bounds = array<i64: 4, 32>}, {pipeline_mode = #tpu.pipeline_mode<synchronous>, transform_indices = @transform_2, window_bounds = array<i64: 32, 4>}, {transform_indices = @transform_3, window_bounds = array<i64: 2, 1, 32>}]} {
    %c0_i32 = arith.constant 0 : i32
    %0 = arith.cmpi eq, %arg1, %c0_i32 : i32
    %1 = arith.extui %0 : i1 to i32
    %c0_i32_0 = arith.constant 0 : i32
    %2 = arith.cmpi ne, %1, %c0_i32_0 : i32
    scf.if %2 {
      %cst_14 = arith.constant 0.000000e+00 : f32
      %15 = vector.broadcast %cst_14 : f32 to vector<2x32xf32>
      %c0_15 = arith.constant 0 : index
      %c0_16 = arith.constant 0 : index
      %16 = vector.load %arg6[%c0_15, %c0_16] : memref<2x32xf32, #tpu.memory_space<vmem>>, vector<2x32xf32>
      tpu.vector_store %arg6[%c0_15, %c0_16], %15 {strides = array<i32>} : memref<2x32xf32, #tpu.memory_space<vmem>>, vector<2x32xf32>,
      %cst_17 = arith.constant 0xFF800000 : f32
      %17 = vector.broadcast %cst_17 : f32 to vector<2x32xf32>
      %c0_18 = arith.constant 0 : index
      %c0_19 = arith.constant 0 : index
      %18 = vector.load %arg7[%c0_18, %c0_19] : memref<2x32xf32, #tpu.memory_space<vmem>>, vector<2x32xf32>
      tpu.vector_store %arg7[%c0_18, %c0_19], %17 {strides = array<i32>} : memref<2x32xf32, #tpu.memory_space<vmem>>, vector<2x32xf32>,
    } else {
    }
    %c0 = arith.constant 0 : index
    %c0_1 = arith.constant 0 : index
    %c0_2 = arith.constant 0 : index
    %3 = vector.load %arg2[%c0, %c0_1, %c0_2] : memref<2x32x256xf32, #tpu.memory_space<vmem>>, vector<2x32x256xf32>
    %c0_3 = arith.constant 0 : index
    %c0_4 = arith.constant 0 : index
    %4 = vector.load %arg6[%c0_3, %c0_4] : memref<2x32xf32, #tpu.memory_space<vmem>>, vector<2x32xf32>
    %cst = arith.constant dense<0.000000e+00> : vector<2x32xf32>
    %5 = vector.multi_reduction <add>, %3, %cst [2] : vector<2x32x256xf32> to vector<2x32xf32>
    %6 = arith.addf %4, %5 : vector<2x32xf32>
    %c0_5 = arith.constant 0 : index
    %c0_6 = arith.constant 0 : index
    %7 = vector.load %arg6[%c0_5, %c0_6] : memref<2x32xf32, #tpu.memory_space<vmem>>, vector<2x32xf32>
    tpu.vector_store %arg6[%c0_5, %c0_6], %6 {strides = array<i32>} : memref<2x32xf32, #tpu.memory_space<vmem>>, vector<2x32xf32>,
    %c0_7 = arith.constant 0 : index
    %c0_8 = arith.constant 0 : index
    %8 = vector.load %arg7[%c0_7, %c0_8] : memref<2x32xf32, #tpu.memory_space<vmem>>, vector<2x32xf32>
    %cst_9 = arith.constant dense<0xFF800000> : vector<2x32xf32>
    %9 = vector.multi_reduction <maximumf>, %3, %cst_9 [2] : vector<2x32x256xf32> to vector<2x32xf32>
    %10 = arith.maximumf %8, %9 : vector<2x32xf32>
    %c0_10 = arith.constant 0 : index
    %c0_11 = arith.constant 0 : index
    %11 = vector.load %arg7[%c0_10, %c0_11] : memref<2x32xf32, #tpu.memory_space<vmem>>, vector<2x32xf32>
    tpu.vector_store %arg7[%c0_10, %c0_11], %10 {strides = array<i32>} : memref<2x32xf32, #tpu.memory_space<vmem>>, vector<2x32xf32>,
    %c0_i32_12 = arith.constant 0 : i32
    %12 = arith.cmpi eq, %arg1, %c0_i32_12 : i32
    %13 = arith.extui %12 : i1 to i32
    %c0_i32_13 = arith.constant 0 : i32
    %14 = arith.cmpi ne, %13, %c0_i32_13 : i32
    scf.if %14 {
      %c0_14 = arith.constant 0 : index
      %c0_15 = arith.constant 0 : index
      %15 = vector.load %arg6[%c0_14, %c0_15] : memref<2x32xf32, #tpu.memory_space<vmem>>, vector<2x32xf32>
      %cst_16 = arith.constant 3.906250e-03 : f32
      %16 = vector.broadcast %cst_16 : f32 to vector<2x32xf32>
      %17 = arith.mulf %15, %16 : vector<2x32xf32>
      %c0_17 = arith.constant 0 : index
      %c0_18 = arith.constant 0 : index
      %18 = vector.load %arg7[%c0_17, %c0_18] : memref<2x32xf32, #tpu.memory_space<vmem>>, vector<2x32xf32>
      %19 = tpu.concatenate %17, %18 in 0 : vector<2x32xf32>, vector<2x32xf32> -> vector<4x32xf32>
      %c0_19 = arith.constant 0 : index
      %c0_20 = arith.constant 0 : index
      %20 = vector.load %arg3[%c0_19, %c0_20] : memref<4x32xf32, #tpu.memory_space<vmem>>, vector<4x32xf32>
      %cst_21 = arith.constant dense<0.000000e+00> : vector<4x4xf32>
      %21 = tpu.matmul %19, %20, %cst_21 {dimension_numbers = #tpu.dot_dimension_numbers<[1], [1], [0], [0], [0, 0, 1, 0], [], []>} : vector<4x32xf32>, vector<4x32xf32>, vector<4x4xf32> -> vector<4x4xf32>
      %cst_22 = arith.constant 0.000000e+00 : f32
      %22 = vector.broadcast %cst_22 : f32 to vector<4x4xf32>
      %23 = arith.maximumf %21, %22 : vector<4x4xf32>
      %c0_23 = arith.constant 0 : index
      %c0_24 = arith.constant 0 : index
      %24 = vector.load %arg4[%c0_23, %c0_24] : memref<32x4xf32, #tpu.memory_space<vmem>>, vector<32x4xf32>
      %cst_25 = arith.constant dense<0.000000e+00> : vector<4x32xf32>
      %25 = tpu.matmul %23, %24, %cst_25 {dimension_numbers = #tpu.dot_dimension_numbers<[1], [1], [0], [0], [0, 0, 1, 0], [], []>} : vector<4x4xf32>, vector<32x4xf32>, vector<4x32xf32> -> vector<4x32xf32>
      %26 = vector.extract_strided_slice %25 {offsets = [0, 0], sizes = [2, 32], strides = [1, 1]} : vector<4x32xf32> to vector<2x32xf32>
      %27 = vector.extract_strided_slice %25 {offsets = [2, 0], sizes = [2, 32], strides = [1, 1]} : vector<4x32xf32> to vector<2x32xf32>
      %28 = arith.addf %26, %27 : vector<2x32xf32>
      %29 = arith.negf %28 : vector<2x32xf32>
      %30 = math.exp %29 : vector<2x32xf32>
      %cst_26 = arith.constant 1.000000e+00 : f32
      %31 = vector.broadcast %cst_26 : f32 to vector<2x32xf32>
      %32 = arith.addf %31, %30 : vector<2x32xf32>
      %33 = arith.divf %31, %32 : vector<2x32xf32>
      %34 = vector.shape_cast %33 : vector<2x32xf32> to vector<2x1x32xf32>
      %c0_27 = arith.constant 0 : index
      %c0_28 = arith.constant 0 : index
      %c0_29 = arith.constant 0 : index
      %35 = vector.load %arg5[%c0_27, %c0_28, %c0_29] : memref<2x1x32xf32, #tpu.memory_space<vmem>>, vector<2x1x32xf32>
      tpu.vector_store %arg5[%c0_27, %c0_28, %c0_29], %34 {strides = array<i32>} : memref<2x1x32xf32, #tpu.memory_space<vmem>>, vector<2x1x32xf32>,
    } else {
    }
    return
  }
  func.func @transform_0(%arg0: i32, %arg1: i32) -> (i32, i32, i32) {
    %c0_i32 = arith.constant 0 : i32
    %c0_i32_0 = arith.constant 0 : i32
    return %arg0, %c0_i32, %arg1 : i32, i32, i32
  }
  func.func @transform_1(%arg0: i32, %arg1: i32) -> (i32, i32) {
    %c0_i32 = arith.constant 0 : i32
    %c0_i32_0 = arith.constant 0 : i32
    %c0_i32_1 = arith.constant 0 : i32
    return %c0_i32, %c0_i32_0 : i32, i32
  }
  func.func @transform_2(%arg0: i32, %arg1: i32) -> (i32, i32) {
    %c0_i32 = arith.constant 0 : i32
    %c0_i32_0 = arith.constant 0 : i32
    %c0_i32_1 = arith.constant 0 : i32
    return %c0_i32, %c0_i32_0 : i32, i32
  }
  func.func @transform_3(%arg0: i32, %arg1: i32) -> (i32, i32, i32) {
    %c0_i32 = arith.constant 0 : i32
    %c0_i32_0 = arith.constant 0 : i32
    %c0_i32_1 = arith.constant 0 : i32
    return %arg0, %c0_i32, %c0_i32_0 : i32, i32, i32
  }
}

</mosaic_0001>

<llo_original>
// kernel: tpu_custom_call.1
$region0: #{tpu_custom_call.1}
  #allocation0 [shape = 'u32[]', space=smem, size = 0x4, offset = 0x4, fixed_abs, tag = 'smem constant byte address 0x4 - core index']
  #allocation1 [shape = 'u32[144,128]{1,0:T(1,128)}', space=vmem, size = 0x12000, scoped, tag = 'internal scratch']
  #allocation2 [shape = 'f32[2,32]{1,0:T(2,128)}', space=vmem, size = 0x400, scoped, tag = 'scratch operand']
  #allocation3 [shape = 'f32[2,32]{1,0:T(2,128)}', space=vmem, size = 0x400, scoped, tag = 'scratch operand']
  %s0 = inlined_call_operand.hbm [shape: f32[2,32,256], index: 0, kind: input, shape index: {}]
  %s1 = inlined_call_operand.vmem [shape: f32[4,32], index: 1, kind: input, shape index: {}]
  %s2 = inlined_call_operand.vmem [shape: f32[32,4], index: 2, kind: input, shape index: {}]
  %s3 = inlined_call_operand.hbm [shape: f32[2,1,32], index: 3, kind: output, shape index: {}]
  %s4 = sld [smem:[#allocation0]]
  $region34: #{tpu_custom_call.1} parent=0
    _
  %s6 = ssub.s32 1, %s4
  %s7 = scalar_select 0, %s6, %s4
  $region1: #{tpu_custom_call.1} parent=0
    #allocation4 [shape = 'u8[65536]{0}', space=vmem, size = 0x10000, scoped, tag = 'input window, operand 0, single buffered']
    #allocation5 [shape = 's32[1]{0}', space=sflag, size = 0x4, scoped, tag = 'scoped memory for tpu_custom_call.1']
    #allocation6 [shape = 's32[1]{0}', space=sflag, size = 0x4, scoped, tag = 'scoped memory for tpu_custom_call.1']
    #allocation7 [shape = 'u8[1024]{0}', space=vmem, size = 0x400, scoped, tag = 'output window, operand 0, single buffered']
    %8 = vsyncpa [#allocation5], 0
    %9 = vsyncpa [#allocation6], 0
    // Predicated region
    $region2: #{tpu_custom_call.1} parent=1 // pred_check
      _
    $region3: #{tpu_custom_call.1} parent=1 // pred_check_branch
      %11 = sbr.rel (0) target = $region5
    $region4: #{tpu_custom_call.1} parent=1 // pred_region
      %s13 = ssub.s32 2048, 2048
      %14 = vsyncadd [#allocation5], %s13
      %s15 = sshll.u32 [#allocation4], 4
      %s16 = int_to_ptr.vmem [resolvable:$true] %s15
      %21 = dma.hbm_to_vmem [thread:$0]  %s0, 2048, %s16, [#allocation5], 256, 256, 16
    $region5: #{tpu_custom_call.1} parent=1 // pred_fallthru
      _
    // Predicated region
    $region6: #{tpu_custom_call.1} parent=1 // pred_check
      _
    $region7: #{tpu_custom_call.1} parent=1 // pred_check_branch
      %23 = sbr.rel (0) target = $region9
    $region8: #{tpu_custom_call.1} parent=1 // pred_region
      _
    $region9: #{tpu_custom_call.1} parent=1 // pred_fallthru
      _
    // Predicated region
    $region10: #{tpu_custom_call.1} parent=1 // pred_check
      _
    $region11: #{tpu_custom_call.1} parent=1 // pred_check_branch
      %25 = sbr.rel (0) target = $region13
    $region12: #{tpu_custom_call.1} parent=1 // pred_region
      _
    $region13: #{tpu_custom_call.1} parent=1 // pred_fallthru
      _
    // Predicated region
    $region14: #{tpu_custom_call.1} parent=1 // pred_check
      _
    $region15: #{tpu_custom_call.1} parent=1 // pred_check_branch
      %27 = sbr.rel (0) target = $region17
    $region16: #{tpu_custom_call.1} parent=1 // pred_region
      %28 = dma.done [#allocation5], 2048
    $region17: #{tpu_custom_call.1} parent=1 // pred_fallthru
      _
    %p29 = scmp.eq.s32.totalorder 0, 0
    // Predicated region
    $region18: #{tpu_custom_call.1} parent=1 // pred_check
      %p30 = pneg %p29
    $region19: #{tpu_custom_call.1} parent=1 // pred_check_branch
      %32 = sbr.rel (%p30) target = $region21
    $region20: #{tpu_custom_call.1} parent=1 // pred_region
      %vm33 = vcmask 254976
      %34 = vst.msk [vmem:[#allocation2] sm:$0x3] %vm33, 0.0
      %35 = vst.msk [vmem:[#allocation3] sm:$0x3] %vm33, -inf
    $region21: #{tpu_custom_call.1} parent=1 // pred_fallthru
      _
    %v36 = vld [vmem:[#allocation4] sm:$0xff]
    %v37 = vld [vmem:[#allocation4 + $0x8] sm:$0xff]
    %v38 = vld [vmem:[#allocation4 + $0x10] sm:$0xff]
    %v39 = vld [vmem:[#allocation4 + $0x18] sm:$0xff]
    %v40 = vld [vmem:[#allocation4 + $0x20] sm:$0xff]
    %v41 = vld [vmem:[#allocation4 + $0x28] sm:$0xff]
    %v42 = vld [vmem:[#allocation4 + $0x30] sm:$0xff]
    %v43 = vld [vmem:[#allocation4 + $0x38] sm:$0xff]
    %v44 = vld [vmem:[#allocation4 + $0x40] sm:$0xff]
    %v45 = vld [vmem:[#allocation4 + $0x48] sm:$0xff]
    %v46 = vld [vmem:[#allocation4 + $0x50] sm:$0xff]
    %v47 = vld [vmem:[#allocation4 + $0x58] sm:$0xff]
    %v48 = vld [vmem:[#allocation4 + $0x60] sm:$0xff]
    %v49 = vld [vmem:[#allocation4 + $0x68] sm:$0xff]
    %v50 = vld [vmem:[#allocation4 + $0x70] sm:$0xff]
    %v51 = vld [vmem:[#allocation4 + $0x78] sm:$0xff]
    %v52 = vld [vmem:[#allocation2] sm:$0x3]
    %v53 = vadd.f32 %v36, %v37
    %54 = vadd.xlane.f32.xlu0 %v53
    %v55 = vpop.xlane.xlu0 %54
    %v56 = vadd.f32 %v38, %v39
    %57 = vadd.xlane.f32.xlu0 %v56
    %v58 = vpop.xlane.xlu0 %57
    %v59 = vadd.f32 %v40, %v41
    %60 = vadd.xlane.f32.xlu0 %v59
    %v61 = vpop.xlane.xlu0 %60
    %v62 = vadd.f32 %v42, %v43
    %63 = vadd.xlane.f32.xlu0 %v62
    %v64 = vpop.xlane.xlu0 %63
    %v65 = vadd.f32 %v44, %v45
    %66 = vadd.xlane.f32.xlu0 %v65
    %v67 = vpop.xlane.xlu0 %66
    %v68 = vadd.f32 %v46, %v47
    %69 = vadd.xlane.f32.xlu0 %v68
    %v70 = vpop.xlane.xlu0 %69
    %v71 = vadd.f32 %v48, %v49
    %72 = vadd.xlane.f32.xlu0 %v71
    %v73 = vpop.xlane.xlu0 %72
    %v74 = vadd.f32 %v50, %v51
    %75 = vadd.xlane.f32.xlu0 %v74
    %v76 = vpop.xlane.xlu0 %75
    %v85 = vlaneseq
    %v86 = vand.u32 %v85, 127
    %v87 = vlaneseq
    %v88 = vshrl.u32 %v87, 7
    %v89 = vsub.s32 %v86, %v88
    %v90 = vrot.slane %v55, %v89
    %v91 = vadd.s32 %v86, 4294967288
    %v92 = vlaneseq
    %v93 = vshrl.u32 %v92, 7
    %v94 = vsub.s32 %v91, %v93
    %v95 = vrot.slane %v58, %v94
    %vm96 = vcmask 130112
    %v97 = vsel %vm96, %v95, %v90
    %v98 = vadd.s32 %v86, 4294967280
    %v99 = vlaneseq
    %v100 = vshrl.u32 %v99, 7
    %v101 = vsub.s32 %v98, %v100
    %v102 = vrot.slane %v61, %v101
    %vm103 = vcmask 195712
    %v104 = vsel %vm103, %v102, %v97
    %v105 = vadd.s32 %v86, 4294967272
    %v106 = vlaneseq
    %v107 = vshrl.u32 %v106, 7
    %v108 = vsub.s32 %v105, %v107
    %v109 = vrot.slane %v64, %v108
    %vm110 = vcmask 261312
    %v111 = vsel %vm110, %v109, %v104
    %v112 = vlaneseq
    %v113 = vshrl.u32 %v112, 7
    %v114 = vsub.s32 %v86, %v113
    %v115 = vrot.slane %v67, %v114
    %v116 = vlaneseq
    %v117 = vshrl.u32 %v116, 7
    %v118 = vsub.s32 %v91, %v117
    %v119 = vrot.slane %v70, %v118
    %v120 = vsel %vm96, %v119, %v115
    %v121 = vlaneseq
    %v122 = vshrl.u32 %v121, 7
    %v123 = vsub.s32 %v98, %v122
    %v124 = vrot.slane %v73, %v123
    %v125 = vsel %vm103, %v124, %v120
    %v126 = vlaneseq
    %v127 = vshrl.u32 %v126, 7
    %v128 = vsub.s32 %v105, %v127
    %v129 = vrot.slane %v76, %v128
    %v130 = vsel %vm110, %v129, %v125
    %vm131 = vcmask 1041409
    %v132 = vsel %vm131, %v130, %v111
    %v134 = vadd.f32 %v52, %v132
    %vm135 = vcmask 254976
    %136 = vst.msk [vmem:[#allocation2] sm:$0x3] %vm135, %v134
    %v137 = vld [vmem:[#allocation3] sm:$0x3]
    %v138 = vmax.f32 %v36, %v37
    %139 = vmax.xlane.f32.xlu0 %v138
    %v140 = vpop.xlane.xlu0 %139
    %v141 = vmax.f32 %v38, %v39
    %142 = vmax.xlane.f32.xlu0 %v141
    %v143 = vpop.xlane.xlu0 %142
    %v144 = vmax.f32 %v40, %v41
    %145 = vmax.xlane.f32.xlu0 %v144
    %v146 = vpop.xlane.xlu0 %145
    %v147 = vmax.f32 %v42, %v43
    %148 = vmax.xlane.f32.xlu0 %v147
    %v149 = vpop.xlane.xlu0 %148
    %v150 = vmax.f32 %v44, %v45
    %151 = vmax.xlane.f32.xlu0 %v150
    %v152 = vpop.xlane.xlu0 %151
    %v153 = vmax.f32 %v46, %v47
    %154 = vmax.xlane.f32.xlu0 %v153
    %v155 = vpop.xlane.xlu0 %154
    %v156 = vmax.f32 %v48, %v49
    %157 = vmax.xlane.f32.xlu0 %v156
    %v158 = vpop.xlane.xlu0 %157
    %v159 = vmax.f32 %v50, %v51
    %160 = vmax.xlane.f32.xlu0 %v159
    %v161 = vpop.xlane.xlu0 %160
    %v170 = vlaneseq
    %v171 = vshrl.u32 %v170, 7
    %v172 = vsub.s32 %v86, %v171
    %v173 = vrot.slane %v140, %v172
    %v174 = vlaneseq
    %v175 = vshrl.u32 %v174, 7
    %v176 = vsub.s32 %v91, %v175
    %v177 = vrot.slane %v143, %v176
    %v178 = vsel %vm96, %v177, %v173
    %v179 = vlaneseq
    %v180 = vshrl.u32 %v179, 7
    %v181 = vsub.s32 %v98, %v180
    %v182 = vrot.slane %v146, %v181
    %v183 = vsel %vm103, %v182, %v178
    %v184 = vlaneseq
    %v185 = vshrl.u32 %v184, 7
    %v186 = vsub.s32 %v105, %v185
    %v187 = vrot.slane %v149, %v186
    %v188 = vsel %vm110, %v187, %v183
    %v189 = vlaneseq
    %v190 = vshrl.u32 %v189, 7
    %v191 = vsub.s32 %v86, %v190
    %v192 = vrot.slane %v152, %v191
    %v193 = vlaneseq
    %v194 = vshrl.u32 %v193, 7
    %v195 = vsub.s32 %v91, %v194
    %v196 = vrot.slane %v155, %v195
    %v197 = vsel %vm96, %v196, %v192
    %v198 = vlaneseq
    %v199 = vshrl.u32 %v198, 7
    %v200 = vsub.s32 %v98, %v199
    %v201 = vrot.slane %v158, %v200
    %v202 = vsel %vm103, %v201, %v197
    %v203 = vlaneseq
    %v204 = vshrl.u32 %v203, 7
    %v205 = vsub.s32 %v105, %v204
    %v206 = vrot.slane %v161, %v205
    %v207 = vsel %vm110, %v206, %v202
    %v208 = vsel %vm131, %v207, %v188
    %v210 = vmax.f32 %v137, %v208
    %211 = vst.msk [vmem:[#allocation3] sm:$0x3] %vm135, %v210
    // Predicated region
    $region22: #{tpu_custom_call.1} parent=1 // pred_check
      %p212 = pneg %p29
    $region23: #{tpu_custom_call.1} parent=1 // pred_check_branch
      %214 = sbr.rel (%p212) target = $region25
    $region24: #{tpu_custom_call.1} parent=1 // pred_region
      %v215 = vld [vmem:[#allocation2] sm:$0x3]
      %v216 = vmul.f32 %v215, 0.00390625
      %v217 = vld [vmem:[#allocation3] sm:$0x3]
      %v219 = vrot.slane %v217, 6
      %vm221 = vcmask 1041408
      %v222 = vsel %vm221, %v216, %v219
      %v223 = vld [vmem:[%s1] sm:$0xf]
      %vm224 = vcmask 261120
      %v226 = vsel %vm224, %v222, 0
      %v229 = vsel %vm224, %v223, 0
      %231 = vmatprep.subr.mxu0 0.0
      %232 = vmatpush1.xpose.msra.mxu0 0.0
      %233 = vmatprep.subr.mxu0 0.0
      %234 = vmatpush1.xpose.msra.mxu0 0.0
      %235 = vmatprep.subr.mxu0 0.0
      %236 = vmatpush1.xpose.msra.mxu0 0.0
      %237 = vmatprep.subr.mxu0 0.0
      %238 = vmatpush1.xpose.msra.mxu0 0.0
      %239 = vmatprep.subr.mxu0 0.0
      %240 = vmatpush1.xpose.msra.mxu0 0.0
      %241 = vmatprep.subr.mxu0 0.0
      %242 = vmatpush1.xpose.msra.mxu0 0.0
      %243 = vmatprep.subr.mxu0 0.0
      %244 = vmatpush1.xpose.msra.mxu0 0.0
      %245 = vmatprep.subr.mxu0 0.0
      %246 = vmatpush1.xpose.msra.mxu0 0.0
      %247 = vmatprep.subr.mxu0 0.0
      %248 = vmatpush1.xpose.msra.mxu0 0.0
      %249 = vmatprep.subr.mxu0 0.0
      %250 = vmatpush1.xpose.msra.mxu0 0.0
      %251 = vmatprep.subr.mxu0 0.0
      %252 = vmatpush1.xpose.msra.mxu0 0.0
      %253 = vmatprep.subr.mxu0 0.0
      %254 = vmatpush1.xpose.msra.mxu0 0.0
      %255 = vmatprep.subr.mxu0 0.0
      %256 = vmatpush1.xpose.msra.mxu0 0.0
      %257 = vmatprep.subr.mxu0 0.0
      %258 = vmatpush1.xpose.msra.mxu0 0.0
      %259 = vmatprep.subr.mxu0 0.0
      %260 = vmatpush1.xpose.msra.mxu0 0.0
      %261 = vmatprep.subr.mxu0 0.0
      %262 = vmatpush1.xpose.msra.mxu0 %v229
      %263 = vmatprep.subr.mxu0 0.0
      %264 = vmatpush2.xpose.msra.mxu0 0.0
      %265 = vmatprep.subr.mxu0 0.0
      %266 = vmatpush2.xpose.msra.mxu0 0.0
      %267 = vmatprep.subr.mxu0 0.0
      %268 = vmatpush2.xpose.msra.mxu0 0.0
      %269 = vmatprep.subr.mxu0 0.0
      %270 = vmatpush2.xpose.msra.mxu0 0.0
      %271 = vmatprep.subr.mxu0 0.0
      %272 = vmatpush2.xpose.msra.mxu0 0.0
      %273 = vmatprep.subr.mxu0 0.0
      %274 = vmatpush2.xpose.msra.mxu0 0.0
      %275 = vmatprep.subr.mxu0 0.0
      %276 = vmatpush2.xpose.msra.mxu0 0.0
      %277 = vmatprep.subr.mxu0 0.0
      %278 = vmatpush2.xpose.msra.mxu0 0.0
      %279 = vmatprep.subr.mxu0 0.0
      %280 = vmatpush2.xpose.msra.mxu0 0.0
      %281 = vmatprep.subr.mxu0 0.0
      %282 = vmatpush2.xpose.msra.mxu0 0.0
      %283 = vmatprep.subr.mxu0 0.0
      %284 = vmatpush2.xpose.msra.mxu0 0.0
      %285 = vmatprep.subr.mxu0 0.0
      %286 = vmatpush2.xpose.msra.mxu0 0.0
      %287 = vmatprep.subr.mxu0 0.0
      %288 = vmatpush2.xpose.msra.mxu0 0.0
      %289 = vmatprep.subr.mxu0 0.0
      %290 = vmatpush2.xpose.msra.mxu0 0.0
      %291 = vmatprep.subr.mxu0 0.0
      %292 = vmatpush2.xpose.msra.mxu0 0.0
      %293 = vmatprep.subr.mxu0 0.0
      %294 = vmatpush2.xpose.msra.mxu0 0.0
      %295 = vmatprep.mubr.f32.mxu0 0.0
      %296 = vmatmul.mubr.f32.gmra.mxu0 %v226
      %v297 = vpop.f32.mrf.mxu0
      %v298 = vadd.f32 0.0, %v297
      %v299 = vpop.f32.mrf.mxu0
      %300 = vdwg.mxu0
      %v301 = vmax.f32 %v298, 0.0
      %v302 = vld [vmem:[%s2] sm:$0xff]
      %v303 = vld [vmem:[%s2 + $0x8] sm:$0xff]
      %v304 = vld [vmem:[%s2 + $0x10] sm:$0xff]
      %v305 = vld [vmem:[%s2 + $0x18] sm:$0xff]
      %vm306 = vcmask 31744
      %v308 = vsel %vm306, %v301, 0
      %v311 = vsel %vm306, %v302, 0
      %v314 = vsel %vm306, %v303, 0
      %v317 = vsel %vm306, %v304, 0
      %v320 = vsel %vm306, %v305, 0
      %322 = vmatprep.subr.mxu0 0.0
      %323 = vmatpush1.xpose.msra.mxu0 0.0
      %324 = vmatprep.subr.mxu0 0.0
      %325 = vmatpush1.xpose.msra.mxu0 0.0
      %326 = vmatprep.subr.mxu0 0.0
      %327 = vmatpush1.xpose.msra.mxu0 0.0
      %328 = vmatprep.subr.mxu0 0.0
      %329 = vmatpush1.xpose.msra.mxu0 0.0
      %330 = vmatprep.subr.mxu0 0.0
      %331 = vmatpush1.xpose.msra.mxu0 0.0
      %332 = vmatprep.subr.mxu0 0.0
      %333 = vmatpush1.xpose.msra.mxu0 0.0
      %334 = vmatprep.subr.mxu0 0.0
      %335 = vmatpush1.xpose.msra.mxu0 0.0
      %336 = vmatprep.subr.mxu0 0.0
      %337 = vmatpush1.xpose.msra.mxu0 0.0
      %338 = vmatprep.subr.mxu0 0.0
      %339 = vmatpush1.xpose.msra.mxu0 0.0
      %340 = vmatprep.subr.mxu0 0.0
      %341 = vmatpush1.xpose.msra.mxu0 0.0
      %342 = vmatprep.subr.mxu0 0.0
      %343 = vmatpush1.xpose.msra.mxu0 0.0
      %344 = vmatprep.subr.mxu0 0.0
      %345 = vmatpush1.xpose.msra.mxu0 0.0
      %346 = vmatprep.subr.mxu0 0.0
      %347 = vmatpush1.xpose.msra.mxu0 %v320
      %348 = vmatprep.subr.mxu0 0.0
      %349 = vmatpush1.xpose.msra.mxu0 %v317
      %350 = vmatprep.subr.mxu0 0.0
      %351 = vmatpush1.xpose.msra.mxu0 %v314
      %352 = vmatprep.subr.mxu0 0.0
      %353 = vmatpush1.xpose.msra.mxu0 %v311
      %354 = vmatprep.subr.mxu0 0.0
      %355 = vmatpush2.xpose.msra.mxu0 0.0
      %356 = vmatprep.subr.mxu0 0.0
      %357 = vmatpush2.xpose.msra.mxu0 0.0
      %358 = vmatprep.subr.mxu0 0.0
      %359 = vmatpush2.xpose.msra.mxu0 0.0
      %360 = vmatprep.subr.mxu0 0.0
      %361 = vmatpush2.xpose.msra.mxu0 0.0
      %362 = vmatprep.subr.mxu0 0.0
      %363 = vmatpush2.xpose.msra.mxu0 0.0
      %364 = vmatprep.subr.mxu0 0.0
      %365 = vmatpush2.xpose.msra.mxu0 0.0
      %366 = vmatprep.subr.mxu0 0.0
      %367 = vmatpush2.xpose.msra.mxu0 0.0
      %368 = vmatprep.subr.mxu0 0.0
      %369 = vmatpush2.xpose.msra.mxu0 0.0
      %370 = vmatprep.subr.mxu0 0.0
      %371 = vmatpush2.xpose.msra.mxu0 0.0
      %372 = vmatprep.subr.mxu0 0.0
      %373 = vmatpush2.xpose.msra.mxu0 0.0
      %374 = vmatprep.subr.mxu0 0.0
      %375 = vmatpush2.xpose.msra.mxu0 0.0
      %376 = vmatprep.subr.mxu0 0.0
      %377 = vmatpush2.xpose.msra.mxu0 0.0
      %378 = vmatprep.subr.mxu0 0.0
      %379 = vmatpush2.xpose.msra.mxu0 0.0
      %380 = vmatprep.subr.mxu0 0.0
      %381 = vmatpush2.xpose.msra.mxu0 0.0
      %382 = vmatprep.subr.mxu0 0.0
      %383 = vmatpush2.xpose.msra.mxu0 0.0
      %384 = vmatprep.subr.mxu0 0.0
      %385 = vmatpush2.xpose.msra.mxu0 0.0
      %386 = vmatprep.mubr.f32.mxu0 0.0
      %387 = vmatmul.mubr.f32.gmra.mxu0 %v308
      %v388 = vpop.f32.mrf.mxu0
      %v389 = vadd.f32 0.0, %v388
      %v390 = vpop.f32.mrf.mxu0
      %391 = vdwg.mxu0
      %v393 = vrot.slane %v389, 2
      %v395 = vadd.f32 %v389, %v393
      %v396 = vxor.u32 %v395, 2147483648
      %v397 = vmul.f32 %v396, 1.442695
      %v398 = vpow.pop %v397
      %v399 = vadd.f32 %v398, 1.0
      %v400 = vrcp.pop %v399
      %v401 = vmul.f32 1.0, %v400
      %v404 = vunpack.c.l.s4 1966171168
      %v405 = vunpack.c.0.s8 %v404
      %v406 = vlaneseq
      %v407 = vshrl.u32 %v406, 7
      %v408 = vsub.s32 %v405, %v407
      %v409 = vrot.slane %v401, %v408
      %v410 = vcombine.high %v409, %v409
      %v412 = vunpack.c.l.s4 1966171168
      %v413 = vunpack.c.0.s8 %v412
      %v414 = vlaneseq
      %v415 = vshrl.u32 %v414, 7
      %v416 = vsub.s32 %v413, %v415
      %v417 = vrot.slane %v409, %v416
      %v419 = vunpack.c.l.s4 1966171168
      %v420 = vunpack.c.0.s8 %v419
      %v421 = vlaneseq
      %v422 = vshrl.u32 %v421, 7
      %v423 = vsub.s32 %v420, %v422
      %v424 = vrot.slane %v410, %v423
      %vm427 = vcmask 253952
      %428 = vst.msk [vmem:[#allocation7] sm:$0x1] %vm427, %v417
      %429 = vst.msk [vmem:[#allocation7 + $0x1] sm:$0x1] %vm427, %v424
    $region25: #{tpu_custom_call.1} parent=1 // pred_fallthru
      _
    // Predicated region
    $region26: #{tpu_custom_call.1} parent=1 // pred_check
      _
    $region27: #{tpu_custom_call.1} parent=1 // pred_check_branch
      %431 = sbr.rel (0) target = $region29
    $region28: #{tpu_custom_call.1} parent=1 // pred_region
      %s433 = ssub.s32 32, 32
      %434 = vsyncadd [#allocation6], %s433
      %s435 = sshll.u32 [#allocation7], 4
      %s436 = int_to_ptr.vmem [resolvable:$true] %s435
      %441 = dma.vmem_to_hbm [thread:$0]  %s436, 32, %s3, [#allocation6], 16, 16, 1
    $region29: #{tpu_custom_call.1} parent=1 // pred_fallthru
      _
    // Predicated region
    $region30: #{tpu_custom_call.1} parent=1 // pred_check
      _
    $region31: #{tpu_custom_call.1} parent=1 // pred_check_branch
      %443 = sbr.rel (0) target = $region33
    $region32: #{tpu_custom_call.1} parent=1 // pred_region
      %444 = dma.done [#allocation6], 32
    $region33: #{tpu_custom_call.1} parent=1 // pred_fallthru
      _
    %445 = vsyncpa [#allocation5], 1
    %446 = vsyncpa [#allocation6], 1

</llo_original>
